<compile_context>
chip_gen: v6e
topology: v6e:2x2x1
jax: 0.10.0
libtpu: 0.0.40
codegen_flags: <defaults>
</compile_context>

<pallas_src>
import numpy as np
import jax
import jax.numpy as jnp
from jax import lax
from jax.experimental import pallas as pl
from jax.experimental.pallas import tpu as pltpu


# ----------------------------------------------------------------------------
# Group utilities (cyclic permutation groups acting on a subset of vocab ids).
# All group structure is static host-side numpy, so it can be folded into
# precomputed relabeling maps and combination matrices.
# ----------------------------------------------------------------------------
def make_cyclic_group(vocab_size, subset):
    """Cyclic group acting on `subset` of vocab indices. Returns dict with
    'g'   : (|G|, V) int32  index maps  v -> g_k(v)
    'inv' : (|G|, V) int32  index maps  v -> g_k^{-1}(v)
    """
    m = len(subset)
    g_list, inv_list = [], []
    for j in range(m):
        perm = np.arange(vocab_size)
        inv = np.arange(vocab_size)
        for a in range(m):
            perm[subset[a]] = subset[(a + j) % m]
            inv[subset[a]] = subset[(a - j) % m]
        g_list.append(perm)
        inv_list.append(inv)
    return {"g": np.stack(g_list).astype(np.int32),
            "inv": np.stack(inv_list).astype(np.int32)}


def _perm_matrix(gk, V):
    """P[u, v] = 1 iff u == g_k(v), so (x @ P)[:, v] = x[:, g_k(v)]
    (the column relabeling used by g_inv_transform_prob_data)."""
    P = np.zeros((V, V), np.float64)
    P[gk, np.arange(V)] = 1.0
    return P


def build_static_tables(in_G, out_G, V_in, V_out, L_in, L_tgt):
    """Host-side (numpy) precompute of everything that depends only on the groups:
       comp_in[i, k]  : (V_in,)   token relabel map  g_k^{(i)} o canon_i   (input vocab)
       comp_tgt[i, k] : (V_out,)  token relabel map  g_k^{(i)} o canon_i   (output vocab)
       C[i, k]        : (V_out, V_out)  folds g_inv_transform_prob_data + mean over G_i +
                        the averaging over all *other* output groups, so
                        branch_i = sum_k logprobs_{i,k} @ C[i, k]
       S              : (|G|*L_tgt, |G|*L_in) per-group-element encoder mean-pool matrix
    """
    num_G = len(in_G)
    sizes = [g["g"].shape[0] for g in in_G]
    assert all(s == sizes[0] for s in sizes), "all groups must have equal order here"
    # TODO(synk): unequal group orders would need per-branch padding of the batched axis.
    G = sizes[0]

    comp_in = np.zeros((num_G, G, V_in), np.int32)
    comp_tgt = np.zeros((num_G, G, V_out), np.int32)
    C = np.zeros((num_G, G, V_out, V_out), np.float32)

    for i in range(num_G):
        others = [j for j in range(num_G) if j != i]

        # g_invariant_data: canonicalize tokens under every *other* group.
        # TODO(synk): exact repo g_invariant_data approximated as orbit-min canonicalization.
        canon_in = np.arange(V_in)
        canon_out = np.arange(V_out)
        for j in others:
            canon_in = in_G[j]["inv"].min(axis=0)[canon_in]
            canon_out = out_G[j]["inv"].min(axis=0)[canon_out]

        # averaged inverse-relabel matrices of the remaining output groups (applied in order)
        M_other = np.eye(V_out, dtype=np.float64)
        for j in others:
            gj = out_G[j]["g"]
            Mj = np.mean([_perm_matrix(gj[k], V_out) for k in range(gj.shape[0])], axis=0)
            M_other = M_other @ Mj

        for k in range(G):
            comp_in[i, k] = in_G[i]["g"][k][canon_in]
            comp_tgt[i, k] = out_G[i]["g"][k][canon_out]
            Pk = _perm_matrix(out_G[i]["g"][k], V_out)
            C[i, k] = ((Pk @ M_other) / G).astype(np.float32)

    # Per-group-element encoder mean-pool ("segment mean") as a static matrix:
    # ctx_rows = S @ enc broadcasts each element's pooled context over its L_tgt rows.
    S = np.zeros((G * L_tgt, G * L_in), np.float32)
    for k in range(G):
        S[k * L_tgt:(k + 1) * L_tgt, k * L_in:(k + 1) * L_in] = 1.0 / L_in

    return comp_in, comp_tgt, C, S


# ----------------------------------------------------------------------------
# Fused forward: one grid step == one group branch i (marked "parallel" for v7x).
# ----------------------------------------------------------------------------
def multi_equi_scan_forward(params, in_G, out_G, input_tokens, target_tokens,
                            use_teacher_forcing=False):
    # TODO(synk): use_teacher_forcing controls the external pre_model's decode loop; the
    # stand-in pre_model always conditions on the (transformed) target tokens.
    del use_teacher_forcing

    V_in, H = params["emb_in"].shape
    V_out = params["W_out"].shape[1]
    L_in = int(input_tokens.shape[0])
    L_tgt = int(target_tokens.shape[0])
    num_G = len(in_G)

    comp_in, comp_tgt, C, S = build_static_tables(in_G, out_G, V_in, V_out, L_in, L_tgt)
    G = C.shape[1]
    GLi, GLt = G * L_in, G * L_tgt

    # g_invariant_data + g_transform_data collapse to one static relabel map per (i, k);
    # the only runtime work is a tiny int32 gather producing the transformed token ids.
    t_in_ids = jnp.take(jnp.asarray(comp_in), input_tokens.astype(jnp.int32), axis=-1)
    t_tgt_ids = jnp.take(jnp.asarray(comp_tgt), target_tokens.astype(jnp.int32), axis=-1)
    t_in_ids = t_in_ids.reshape(num_G, GLi, 1).astype(jnp.int32)
    t_tgt_ids = t_tgt_ids.reshape(num_G, GLt, 1).astype(jnp.int32)

    C_j = jnp.asarray(C)
    S_j = jnp.asarray(S)

    def kernel(in_ids_ref, tgt_ids_ref, sctx_ref, c_ref,
               ei_ref, we_ref, eo_ref, wd_ref, wo_ref, o_ref):
        # One-hots built in-kernel via broadcasted-iota compare (no f32 one-hot inputs).
        x1h = (in_ids_ref[0, :, :] ==
               lax.broadcasted_iota(jnp.int32, (GLi, V_in), 1)).astype(jnp.float32)
        y1h = (tgt_ids_ref[0, :, :] ==
               lax.broadcasted_iota(jnp.int32, (GLt, V_out), 1)).astype(jnp.float32)

        # pre_model, batched over all |G| group elements of this branch in one matmul chain.
        x_emb = jnp.dot(x1h, ei_ref[...], preferred_element_type=jnp.float32)      # (GLi,H)
        enc = jnp.maximum(
            jnp.dot(x_emb, we_ref[...], preferred_element_type=jnp.float32), 0.0)
        ctx = jnp.dot(sctx_ref[...], enc, preferred_element_type=jnp.float32)      # (GLt,H)
        y_emb = jnp.dot(y1h, eo_ref[...], preferred_element_type=jnp.float32)      # (GLt,H)
        dec = jnp.maximum(
            jnp.dot(y_emb, wd_ref[...], preferred_element_type=jnp.float32) + ctx, 0.0)
        logits = jnp.dot(dec, wo_ref[...], preferred_element_type=jnp.float32)     # (GLt,V)

        # log-softmax (all elementwise math in f32 -> safe on v5e).
        m = jnp.max(logits, axis=-1, keepdims=True)
        z = logits - m
        lse = jnp.log(jnp.sum(jnp.exp(z), axis=-1, keepdims=True))
        logp = z - lse

        # g_inv_transform_prob_data + mean over |G_i| + averaging over the remaining output
        # groups, all folded into C[i, k].  (The reference averages whatever pre_model
        # returns; here those are log-probs, mirroring torch.mean over stacked outputs.)
        acc = jnp.zeros((L_tgt, V_out), jnp.float32)
        for k in range(G):                                   # G is tiny and static: unroll
            pk = logp[k * L_tgt:(k + 1) * L_tgt, :]
            acc = acc + jnp.dot(pk, c_ref[0, k, :, :], preferred_element_type=jnp.float32)
        o_ref[0, :, :] = acc

    branch_out = pl.pallas_call(
        kernel,
        out_shape=jax.ShapeDtypeStruct((num_G, L_tgt, V_out), jnp.float32),
        grid=(num_G,),
        in_specs=[
            pl.BlockSpec((1, GLi, 1), lambda i: (i, 0, 0)),             # input token ids
            pl.BlockSpec((1, GLt, 1), lambda i: (i, 0, 0)),             # target token ids
            pl.BlockSpec((GLt, GLi), lambda i: (0, 0)),                 # segment-mean matrix
            pl.BlockSpec((1, G, V_out, V_out), lambda i: (i, 0, 0, 0)),  # combined C[i]
            pl.BlockSpec((V_in, H), lambda i: (0, 0)),                  # emb_in
            pl.BlockSpec((H, H), lambda i: (0, 0)),                     # W_enc
            pl.BlockSpec((V_out, H), lambda i: (0, 0)),                 # emb_out
            pl.BlockSpec((H, H), lambda i: (0, 0)),                     # W_dec
            pl.BlockSpec((H, V_out), lambda i: (0, 0)),                 # W_out
        ],
        out_specs=pl.BlockSpec((1, L_tgt, V_out), lambda i: (i, 0, 0)),
        compiler_params=pltpu.CompilerParams(dimension_semantics=("parallel",)),
    )(t_in_ids, t_tgt_ids, S_j, C_j,
      params["emb_in"], params["W_enc"], params["emb_out"],
      params["W_dec"], params["W_out"])

    # Final mean over the num_G branches ("perm_mean with identity" == plain mean).
    return jnp.mean(branch_out, axis=0)


# ----------------------------------------------------------------------------
# Main
# ----------------------------------------------------------------------------
if __name__ == "__main__":
    vocab_size = 8
    hidden = 32
    L_in = 8
    L_tgt = 8

    # Two cyclic permutation groups on disjoint vocab-index pairs
    # (eq_word_indices=[2, 7] for group 0; [3, 6] for group 1).
    in_G = [make_cyclic_group(vocab_size, [2, 7]),
            make_cyclic_group(vocab_size, [3, 6])]
    out_G = [make_cyclic_group(vocab_size, [2, 7]),
             make_cyclic_group(vocab_size, [3, 6])]

    # Deterministic pre_model parameters.
    key = jax.random.PRNGKey(0)
    k1, k2, k3, k4, k5, k6 = jax.random.split(key, 6)
    params = {
        "emb_in": 0.1 * jax.random.normal(k1, (vocab_size, hidden), jnp.float32),
        "W_enc": 0.1 * jax.random.normal(k2, (hidden, hidden), jnp.float32),
        "emb_out": 0.1 * jax.random.normal(k3, (vocab_size, hidden), jnp.float32),
        "W_dec": 0.1 * jax.random.normal(k4, (hidden, hidden), jnp.float32),
        "W_out": 0.1 * jax.random.normal(k5, (hidden, vocab_size), jnp.float32),
    }

    # Deterministic token sequences (input_tensor / target_tensor).
    input_tokens = jax.random.randint(k6, (L_in,), 0, vocab_size, dtype=jnp.int32)
    target_tokens = jax.random.randint(jax.random.fold_in(k6, 1), (L_tgt,), 0,
                                       vocab_size, dtype=jnp.int32)

    out = multi_equi_scan_forward(params, in_G, out_G, input_tokens, target_tokens,
                                  use_teacher_forcing=False)
    out = jax.block_until_ready(out)
    assert out.shape == (L_tgt, vocab_size), out.shape
    assert bool(jnp.all(jnp.isfinite(out)))
    print("KERNEL_OK")
</pallas_src>

<mosaic_0001>
module attributes {stable_mosaic.version = 11 : i64} {
  func.func @kernel(%arg0: i32, %arg1: memref<1x16x1xi32, #tpu.memory_space<vmem>>, %arg2: memref<1x16x1xi32, #tpu.memory_space<vmem>>, %arg3: memref<16x16xf32, #tpu.memory_space<vmem>>, %arg4: memref<1x2x8x8xf32, #tpu.memory_space<vmem>>, %arg5: memref<8x32xf32, #tpu.memory_space<vmem>>, %arg6: memref<32x32xf32, #tpu.memory_space<vmem>>, %arg7: memref<8x32xf32, #tpu.memory_space<vmem>>, %arg8: memref<32x32xf32, #tpu.memory_space<vmem>>, %arg9: memref<32x8xf32, #tpu.memory_space<vmem>>, %arg10: memref<1x8x8xf32, #tpu.memory_space<vmem>>) attributes {dimension_semantics = [#tpu.dimension_semantics<parallel>], iteration_bounds = array<i64: 2>, scalar_prefetch = 0 : i64, scratch_operands = 0 : i64, tpu.core_type = #tpu.core_type<tc>, window_params = [{transform_indices = @transform_0, window_bounds = array<i64: 1, 16, 1>}, {transform_indices = @transform_1, window_bounds = array<i64: 1, 16, 1>}, {pipeline_mode = #tpu.pipeline_mode<synchronous>, transform_indices = @transform_2, window_bounds = array<i64: 16, 16>}, {transform_indices = @transform_3, window_bounds = array<i64: 1, 2, 8, 8>}, {pipeline_mode = #tpu.pipeline_mode<synchronous>, transform_indices = @transform_4, window_bounds = array<i64: 8, 32>}, {pipeline_mode = #tpu.pipeline_mode<synchronous>, transform_indices = @transform_5, window_bounds = array<i64: 32, 32>}, {pipeline_mode = #tpu.pipeline_mode<synchronous>, transform_indices = @transform_6, window_bounds = array<i64: 8, 32>}, {pipeline_mode = #tpu.pipeline_mode<synchronous>, transform_indices = @transform_7, window_bounds = array<i64: 32, 32>}, {pipeline_mode = #tpu.pipeline_mode<synchronous>, transform_indices = @transform_8, window_bounds = array<i64: 32, 8>}, {transform_indices = @transform_9, window_bounds = array<i64: 1, 8, 8>}]} {
    %c0 = arith.constant 0 : index
    %c0_0 = arith.constant 0 : index
    %c0_1 = arith.constant 0 : index
    %0 = vector.load %arg1[%c0, %c0_0, %c0_1] : memref<1x16x1xi32, #tpu.memory_space<vmem>>, vector<1x16x1xi32>
    %1 = vector.shape_cast %0 : vector<1x16x1xi32> to vector<16x1xi32>
    %2 = tpu.iota {dimensions = array<i32: 1>} : vector<16x8xi32>
    %3 = vector.broadcast %1 : vector<16x1xi32> to vector<16x8xi32>
    %4 = arith.cmpi eq, %3, %2 : vector<16x8xi32>
    %5 = arith.extui %4 : vector<16x8xi1> to vector<16x8xi32>
    %6 = arith.sitofp %5 : vector<16x8xi32> to vector<16x8xf32>
    %c0_2 = arith.constant 0 : index
    %c0_3 = arith.constant 0 : index
    %c0_4 = arith.constant 0 : index
    %7 = vector.load %arg2[%c0_2, %c0_3, %c0_4] : memref<1x16x1xi32, #tpu.memory_space<vmem>>, vector<1x16x1xi32>
    %8 = vector.shape_cast %7 : vector<1x16x1xi32> to vector<16x1xi32>
    %9 = tpu.iota {dimensions = array<i32: 1>} : vector<16x8xi32>
    %10 = vector.broadcast %8 : vector<16x1xi32> to vector<16x8xi32>
    %11 = arith.cmpi eq, %10, %9 : vector<16x8xi32>
    %12 = arith.extui %11 : vector<16x8xi1> to vector<16x8xi32>
    %13 = arith.sitofp %12 : vector<16x8xi32> to vector<16x8xf32>
    %c0_5 = arith.constant 0 : index
    %c0_6 = arith.constant 0 : index
    %14 = vector.load %arg5[%c0_5, %c0_6] : memref<8x32xf32, #tpu.memory_space<vmem>>, vector<8x32xf32>
    %cst = arith.constant dense<0.000000e+00> : vector<16x32xf32>
    %15 = tpu.matmul %6, %14, %cst {dimension_numbers = #tpu.dot_dimension_numbers<[1], [0], [0], [1], [0, 0, 1, 1], [], []>} : vector<16x8xf32>, vector<8x32xf32>, vector<16x32xf32> -> vector<16x32xf32>
    %c0_7 = arith.constant 0 : index
    %c0_8 = arith.constant 0 : index
    %16 = vector.load %arg6[%c0_7, %c0_8] : memref<32x32xf32, #tpu.memory_space<vmem>>, vector<32x32xf32>
    %cst_9 = arith.constant dense<0.000000e+00> : vector<16x32xf32>
    %17 = tpu.matmul %15, %16, %cst_9 {dimension_numbers = #tpu.dot_dimension_numbers<[1], [0], [0], [1], [0, 0, 1, 1], [], []>} : vector<16x32xf32>, vector<32x32xf32>, vector<16x32xf32> -> vector<16x32xf32>
    %cst_10 = arith.constant 0.000000e+00 : f32
    %18 = vector.broadcast %cst_10 : f32 to vector<16x32xf32>
    %19 = arith.maximumf %17, %18 : vector<16x32xf32>
    %c0_11 = arith.constant 0 : index
    %c0_12 = arith.constant 0 : index
    %20 = vector.load %arg3[%c0_11, %c0_12] : memref<16x16xf32, #tpu.memory_space<vmem>>, vector<16x16xf32>
    %cst_13 = arith.constant dense<0.000000e+00> : vector<16x32xf32>
    %21 = tpu.matmul %20, %19, %cst_13 {dimension_numbers = #tpu.dot_dimension_numbers<[1], [0], [0], [1], [0, 0, 1, 1], [], []>} : vector<16x16xf32>, vector<16x32xf32>, vector<16x32xf32> -> vector<16x32xf32>
    %c0_14 = arith.constant 0 : index
    %c0_15 = arith.constant 0 : index
    %22 = vector.load %arg7[%c0_14, %c0_15] : memref<8x32xf32, #tpu.memory_space<vmem>>, vector<8x32xf32>
    %cst_16 = arith.constant dense<0.000000e+00> : vector<16x32xf32>
    %23 = tpu.matmul %13, %22, %cst_16 {dimension_numbers = #tpu.dot_dimension_numbers<[1], [0], [0], [1], [0, 0, 1, 1], [], []>} : vector<16x8xf32>, vector<8x32xf32>, vector<16x32xf32> -> vector<16x32xf32>
    %c0_17 = arith.constant 0 : index
    %c0_18 = arith.constant 0 : index
    %24 = vector.load %arg8[%c0_17, %c0_18] : memref<32x32xf32, #tpu.memory_space<vmem>>, vector<32x32xf32>
    %cst_19 = arith.constant dense<0.000000e+00> : vector<16x32xf32>
    %25 = tpu.matmul %23, %24, %cst_19 {dimension_numbers = #tpu.dot_dimension_numbers<[1], [0], [0], [1], [0, 0, 1, 1], [], []>} : vector<16x32xf32>, vector<32x32xf32>, vector<16x32xf32> -> vector<16x32xf32>
    %26 = arith.addf %25, %21 : vector<16x32xf32>
    %cst_20 = arith.constant 0.000000e+00 : f32
    %27 = vector.broadcast %cst_20 : f32 to vector<16x32xf32>
    %28 = arith.maximumf %26, %27 : vector<16x32xf32>
    %c0_21 = arith.constant 0 : index
    %c0_22 = arith.constant 0 : index
    %29 = vector.load %arg9[%c0_21, %c0_22] : memref<32x8xf32, #tpu.memory_space<vmem>>, vector<32x8xf32>
    %cst_23 = arith.constant dense<0.000000e+00> : vector<16x8xf32>
    %30 = tpu.matmul %28, %29, %cst_23 {dimension_numbers = #tpu.dot_dimension_numbers<[1], [0], [0], [1], [0, 0, 1, 1], [], []>} : vector<16x32xf32>, vector<32x8xf32>, vector<16x8xf32> -> vector<16x8xf32>
    %cst_24 = arith.constant dense<0xFF800000> : vector<16xf32>
    %31 = vector.multi_reduction <maximumf>, %30, %cst_24 [1] : vector<16x8xf32> to vector<16xf32>
    %32 = vector.shape_cast %31 : vector<16xf32> to vector<16x1xf32>
    %33 = vector.broadcast %32 : vector<16x1xf32> to vector<16x8xf32>
    %34 = arith.subf %30, %33 : vector<16x8xf32>
    %35 = math.exp %34 : vector<16x8xf32>
    %cst_25 = arith.constant dense<0.000000e+00> : vector<16xf32>
    %36 = vector.multi_reduction <add>, %35, %cst_25 [1] : vector<16x8xf32> to vector<16xf32>
    %37 = vector.shape_cast %36 : vector<16xf32> to vector<16x1xf32>
    %38 = math.log %37 : vector<16x1xf32>
    %39 = vector.broadcast %38 : vector<16x1xf32> to vector<16x8xf32>
    %40 = arith.subf %34, %39 : vector<16x8xf32>
    %cst_26 = arith.constant 0.000000e+00 : f32
    %41 = vector.broadcast %cst_26 : f32 to vector<8x8xf32>
    %42 = vector.extract_strided_slice %40 {offsets = [0, 0], sizes = [8, 8], strides = [1, 1]} : vector<16x8xf32> to vector<8x8xf32>
    %c0_27 = arith.constant 0 : index
    %c0_28 = arith.constant 0 : index
    %c0_29 = arith.constant 0 : index
    %c0_30 = arith.constant 0 : index
    %43 = vector.load %arg4[%c0_27, %c0_28, %c0_29, %c0_30] : memref<1x2x8x8xf32, #tpu.memory_space<vmem>>, vector<1x1x8x8xf32>
    %44 = vector.shape_cast %43 : vector<1x1x8x8xf32> to vector<8x8xf32>
    %cst_31 = arith.constant dense<0.000000e+00> : vector<8x8xf32>
    %45 = tpu.matmul %42, %44, %cst_31 {dimension_numbers = #tpu.dot_dimension_numbers<[1], [0], [0], [1], [0, 0, 1, 1], [], []>} : vector<8x8xf32>, vector<8x8xf32>, vector<8x8xf32> -> vector<8x8xf32>
    %46 = arith.addf %41, %45 : vector<8x8xf32>
    %47 = vector.extract_strided_slice %40 {offsets = [8, 0], sizes = [8, 8], strides = [1, 1]} : vector<16x8xf32> to vector<8x8xf32>
    %c0_32 = arith.constant 0 : index
    %c1 = arith.constant 1 : index
    %c0_33 = arith.constant 0 : index
    %c0_34 = arith.constant 0 : index
    %48 = vector.load %arg4[%c0_32, %c1, %c0_33, %c0_34] : memref<1x2x8x8xf32, #tpu.memory_space<vmem>>, vector<1x1x8x8xf32>
    %49 = vector.shape_cast %48 : vector<1x1x8x8xf32> to vector<8x8xf32>
    %cst_35 = arith.constant dense<0.000000e+00> : vector<8x8xf32>
    %50 = tpu.matmul %47, %49, %cst_35 {dimension_numbers = #tpu.dot_dimension_numbers<[1], [0], [0], [1], [0, 0, 1, 1], [], []>} : vector<8x8xf32>, vector<8x8xf32>, vector<8x8xf32> -> vector<8x8xf32>
    %51 = arith.addf %46, %50 : vector<8x8xf32>
    %c0_36 = arith.constant 0 : index
    %c0_37 = arith.constant 0 : index
    %c0_38 = arith.constant 0 : index
    %52 = vector.load %arg10[%c0_36, %c0_37, %c0_38] : memref<1x8x8xf32, #tpu.memory_space<vmem>>, vector<1x8x8xf32>
    %53 = vector.shape_cast %52 : vector<1x8x8xf32> to vector<8x8xf32>
    %54 = vector.shape_cast %51 : vector<8x8xf32> to vector<1x8x8xf32>
    tpu.vector_store %arg10[%c0_36, %c0_37, %c0_38], %54 {strides = array<i32>} : memref<1x8x8xf32, #tpu.memory_space<vmem>>, vector<1x8x8xf32>,
    return
  }
  func.func @transform_0(%arg0: i32) -> (i32, i32, i32) {
    %c0_i32 = arith.constant 0 : i32
    %c0_i32_0 = arith.constant 0 : i32
    %c0_i32_1 = arith.constant 0 : i32
    return %arg0, %c0_i32, %c0_i32_0 : i32, i32, i32
  }
  func.func @transform_1(%arg0: i32) -> (i32, i32, i32) {
    %c0_i32 = arith.constant 0 : i32
    %c0_i32_0 = arith.constant 0 : i32
    %c0_i32_1 = arith.constant 0 : i32
    return %arg0, %c0_i32, %c0_i32_0 : i32, i32, i32
  }
  func.func @transform_2(%arg0: i32) -> (i32, i32) {
    %c0_i32 = arith.constant 0 : i32
    %c0_i32_0 = arith.constant 0 : i32
    %c0_i32_1 = arith.constant 0 : i32
    return %c0_i32, %c0_i32_0 : i32, i32
  }
  func.func @transform_3(%arg0: i32) -> (i32, i32, i32, i32) {
    %c0_i32 = arith.constant 0 : i32
    %c0_i32_0 = arith.constant 0 : i32
    %c0_i32_1 = arith.constant 0 : i32
    %c0_i32_2 = arith.constant 0 : i32
    return %arg0, %c0_i32, %c0_i32_0, %c0_i32_1 : i32, i32, i32, i32
  }
  func.func @transform_4(%arg0: i32) -> (i32, i32) {
    %c0_i32 = arith.constant 0 : i32
    %c0_i32_0 = arith.constant 0 : i32
    %c0_i32_1 = arith.constant 0 : i32
    return %c0_i32, %c0_i32_0 : i32, i32
  }
  func.func @transform_5(%arg0: i32) -> (i32, i32) {
    %c0_i32 = arith.constant 0 : i32
    %c0_i32_0 = arith.constant 0 : i32
    %c0_i32_1 = arith.constant 0 : i32
    return %c0_i32, %c0_i32_0 : i32, i32
  }
  func.func @transform_6(%arg0: i32) -> (i32, i32) {
    %c0_i32 = arith.constant 0 : i32
    %c0_i32_0 = arith.constant 0 : i32
    %c0_i32_1 = arith.constant 0 : i32
    return %c0_i32, %c0_i32_0 : i32, i32
  }
  func.func @transform_7(%arg0: i32) -> (i32, i32) {
    %c0_i32 = arith.constant 0 : i32
    %c0_i32_0 = arith.constant 0 : i32
    %c0_i32_1 = arith.constant 0 : i32
    return %c0_i32, %c0_i32_0 : i32, i32
  }
  func.func @transform_8(%arg0: i32) -> (i32, i32) {
    %c0_i32 = arith.constant 0 : i32
    %c0_i32_0 = arith.constant 0 : i32
    %c0_i32_1 = arith.constant 0 : i32
    return %c0_i32, %c0_i32_0 : i32, i32
  }
  func.func @transform_9(%arg0: i32) -> (i32, i32, i32) {
    %c0_i32 = arith.constant 0 : i32
    %c0_i32_0 = arith.constant 0 : i32
    %c0_i32_1 = arith.constant 0 : i32
    return %arg0, %c0_i32, %c0_i32_0 : i32, i32, i32
  }
}

</mosaic_0001>

<llo_original>
// kernel: tpu_custom_call.1
$region0: #{tpu_custom_call.1}
  #allocation0 [shape = 'u32[]', space=smem, size = 0x4, offset = 0x4, fixed_abs, tag = 'smem constant byte address 0x4 - core index']
  #allocation1 [shape = 'u32[144,128]{1,0:T(1,128)}', space=vmem, size = 0x12000, scoped, tag = 'internal scratch']
  %s0 = inlined_call_operand.vmem [shape: s32[2,16,1], index: 0, kind: input, shape index: {}]
  %s1 = inlined_call_operand.vmem [shape: s32[2,16,1], index: 1, kind: input, shape index: {}]
  %s2 = inlined_call_operand.hbm [shape: f32[16,16], index: 2, kind: input, shape index: {}]
  %s3 = inlined_call_operand.vmem [shape: f32[2,2,8,8], index: 3, kind: input, shape index: {}]
  %s4 = inlined_call_operand.vmem [shape: f32[8,32], index: 4, kind: input, shape index: {}]
  %s5 = inlined_call_operand.vmem [shape: f32[32,32], index: 5, kind: input, shape index: {}]
  %s6 = inlined_call_operand.hbm [shape: f32[8,32], index: 6, kind: input, shape index: {}]
  %s7 = inlined_call_operand.vmem [shape: f32[32,32], index: 7, kind: input, shape index: {}]
  %s8 = inlined_call_operand.vmem [shape: f32[32,8], index: 8, kind: input, shape index: {}]
  %s9 = inlined_call_operand.hbm [shape: f32[2,8,8], index: 9, kind: output, shape index: {}]
  %s10 = sld [smem:[#allocation0]]
  $region77: #{tpu_custom_call.1} parent=0
    _
  %s12 = ssub.s32 1, %s10
  %s13 = scalar_select 0, %s12, %s10
  $region1: #{tpu_custom_call.1} parent=0
    #allocation2 [shape = 'u8[8192]{0}', space=vmem, size = 0x2000, scoped, tag = 'input window, operand 2, single buffered']
    #allocation3 [shape = 's32[2]{0}', space=sflag, size = 0x8, scoped, tag = 'scoped memory for tpu_custom_call.1']
    #allocation4 [shape = 's32[2]{0}', space=sflag, size = 0x8, scoped, tag = 'scoped memory for tpu_custom_call.1']
    #allocation5 [shape = 'u8[4096]{0}', space=vmem, size = 0x1000, scoped, tag = 'input window, operand 6, single buffered']
    #allocation6 [shape = 's32[1]{0}', space=sflag, size = 0x4, scoped, tag = 'scoped memory for tpu_custom_call.1']
    #allocation7 [shape = 'u8[8192]{0}', space=vmem, size = 0x2000, scoped, tag = 'output window, operand 0']
    %14 = vsyncpa [#allocation3], 0
    %15 = vsyncpa [#allocation6], 0
    %16 = vsyncpa [#allocation4], 0
    %s17 = scalar_lea.sflag [#allocation4], 1
    %18 = vsyncpa %s17, 0
    loop: start=0, step=1, limit=4
    $region2: #{tpu_custom_call.1} parent=1 // loop_pre_header
      _
    $region3: #{tpu_custom_call.1} parent=1 // loop_header
      %s20 = sphi 0, %s24
      %p21 = scmp.ge.s32.totalorder %s20, 4
      %s30 = sphi 0, %s32
      %s33 = sphi 0, %s30
      %s34 = sphi 0, %s33
      %s50 = sphi 0, %s34
      %s56 = sphi 0, %s58
      %s59 = sphi 0, %s56
      %s60 = sphi 0, %s59
      %s76 = sphi 0, %s60
      %s80 = sphi 0, %s80
      %s82 = sphi 0, %s80
      %s83 = sphi 0, %s82
      %s97 = sphi 0, %s83
      %s103 = sphi 0, %s105
      %s106 = sphi 0, %s103
      %s107 = sphi 0, %s106
      %s123 = sphi 0, %s107
      %s127 = sphi 0, %s127
      %s129 = sphi 0, %s127
      %s130 = sphi 0, %s129
      %s144 = sphi 0, %s130
      %s148 = sphi 0, %s148
      %s150 = sphi 0, %s148
      %s151 = sphi 0, %s150
      %s165 = sphi 0, %s151
      %s169 = sphi 0, %s169
      %s171 = sphi 0, %s169
      %s172 = sphi 0, %s171
      %s186 = sphi 0, %s172
      %s190 = sphi 0, %s190
      %s192 = sphi 0, %s190
      %s193 = sphi 0, %s192
      %s207 = sphi 0, %s193
      %s211 = sphi 0, %s211
      %s213 = sphi 0, %s211
      %s214 = sphi 0, %s213
      %s228 = sphi 0, %s214
      %s234 = sphi 0, %s236
      %s237 = sphi 0, %s234
      %s238 = sphi 0, %s237
      %s254 = sphi 0, %s238
    $region4: #{tpu_custom_call.1} parent=1 // loop_header_branch
      %23 = sbr.rel (%p21) target = $region8
    $region5: #{tpu_custom_call.1} parent=1 // loop_body
      %s25 = ssub.s32 %s20, 1
      %s26 = ssub.s32 %s20, 2
      %s27 = sadd.s32 %s20, 1
      %s28 = ssub.s32 %s20, %s27
      %p29 = scmp.eq.s32.totalorder %s28, 0
      %s31 = sadd.s32 %s30, 1
      %s32 = scalar_select %p29, %s30, %s31
      %p35 = pneg %p29
      %p36 = scmp.eq.s32.totalorder %s20, 1
      %p37 = por %p35, %p36
      %p38 = scmp.ne.s32.totalorder %s30, %s33
      %p39 = scmp.eq.s32.totalorder %s20, 0
      %p40 = por %p38, %p39
      %p41 = scmp.ne.s32.totalorder %s30, %s33
      %p42 = scmp.eq.s32.totalorder %s25, 1
      %p43 = por %p41, %p42
      %p44 = scmp.ne.s32.totalorder %s33, %s34
      %p45 = scmp.eq.s32.totalorder %s25, 0
      %p46 = por %p44, %p45
      %p47 = scmp.ne.s32.totalorder %s33, %s34
      %p48 = scmp.eq.s32.totalorder %s26, 1
      %p49 = por %p47, %p48
      %p51 = scmp.ne.s32.totalorder %s34, %s50
      %p52 = scmp.eq.s32.totalorder %s26, 0
      %p53 = por %p51, %p52
      %s54 = ssub.s32 %s20, %s27
      %p55 = scmp.eq.s32.totalorder %s54, 0
      %s57 = sadd.s32 %s56, 1
      %s58 = scalar_select %p55, %s56, %s57
      %p61 = pneg %p55
      %p62 = scmp.eq.s32.totalorder %s20, 1
      %p63 = por %p61, %p62
      %p64 = scmp.ne.s32.totalorder %s56, %s59
      %p65 = scmp.eq.s32.totalorder %s20, 0
      %p66 = por %p64, %p65
      %p67 = scmp.ne.s32.totalorder %s56, %s59
      %p68 = scmp.eq.s32.totalorder %s25, 1
      %p69 = por %p67, %p68
      %p70 = scmp.ne.s32.totalorder %s59, %s60
      %p71 = scmp.eq.s32.totalorder %s25, 0
      %p72 = por %p70, %p71
      %p73 = scmp.ne.s32.totalorder %s59, %s60
      %p74 = scmp.eq.s32.totalorder %s26, 1
      %p75 = por %p73, %p74
      %p77 = scmp.ne.s32.totalorder %s60, %s76
      %p78 = scmp.eq.s32.totalorder %s26, 0
      %p79 = por %p77, %p78
      %s81 = sadd.s32 %s80, 1
      %p84 = scmp.eq.s32.totalorder %s20, 1
      %p85 = scmp.ne.s32.totalorder %s80, %s82
      %p86 = scmp.eq.s32.totalorder %s20, 0
      %p87 = por %p85, %p86
      %p88 = scmp.ne.s32.totalorder %s80, %s82
      %p89 = scmp.eq.s32.totalorder %s25, 1
      %p90 = por %p88, %p89
      %p91 = scmp.ne.s32.totalorder %s82, %s83
      %p92 = scmp.eq.s32.totalorder %s25, 0
      %p93 = por %p91, %p92
      %p94 = scmp.ne.s32.totalorder %s82, %s83
      %p95 = scmp.eq.s32.totalorder %s26, 1
      %p96 = por %p94, %p95
      %p98 = scmp.ne.s32.totalorder %s83, %s97
      %p99 = scmp.eq.s32.totalorder %s26, 0
      %p100 = por %p98, %p99
      %s101 = ssub.s32 %s20, %s27
      %p102 = scmp.eq.s32.totalorder %s101, 0
      %s104 = sadd.s32 %s103, 1
      %s105 = scalar_select %p102, %s103, %s104
      %p108 = pneg %p102
      %p109 = scmp.eq.s32.totalorder %s20, 1
      %p110 = por %p108, %p109
      %p111 = scmp.ne.s32.totalorder %s103, %s106
      %p112 = scmp.eq.s32.totalorder %s20, 0
      %p113 = por %p111, %p112
      %p114 = scmp.ne.s32.totalorder %s103, %s106
      %p115 = scmp.eq.s32.totalorder %s25, 1
      %p116 = por %p114, %p115
      %p117 = scmp.ne.s32.totalorder %s106, %s107
      %p118 = scmp.eq.s32.totalorder %s25, 0
      %p119 = por %p117, %p118
      %p120 = scmp.ne.s32.totalorder %s106, %s107
      %p121 = scmp.eq.s32.totalorder %s26, 1
      %p122 = por %p120, %p121
      %p124 = scmp.ne.s32.totalorder %s107, %s123
      %p125 = scmp.eq.s32.totalorder %s26, 0
      %p126 = por %p124, %p125
      %s128 = sadd.s32 %s127, 1
      %p131 = scmp.eq.s32.totalorder %s20, 1
      %p132 = scmp.ne.s32.totalorder %s127, %s129
      %p133 = scmp.eq.s32.totalorder %s20, 0
      %p134 = por %p132, %p133
      %p135 = scmp.ne.s32.totalorder %s127, %s129
      %p136 = scmp.eq.s32.totalorder %s25, 1
      %p137 = por %p135, %p136
      %p138 = scmp.ne.s32.totalorder %s129, %s130
      %p139 = scmp.eq.s32.totalorder %s25, 0
      %p140 = por %p138, %p139
      %p141 = scmp.ne.s32.totalorder %s129, %s130
      %p142 = scmp.eq.s32.totalorder %s26, 1
      %p143 = por %p141, %p142
      %p145 = scmp.ne.s32.totalorder %s130, %s144
      %p146 = scmp.eq.s32.totalorder %s26, 0
      %p147 = por %p145, %p146
      %s149 = sadd.s32 %s148, 1
      %p152 = scmp.eq.s32.totalorder %s20, 1
      %p153 = scmp.ne.s32.totalorder %s148, %s150
      %p154 = scmp.eq.s32.totalorder %s20, 0
      %p155 = por %p153, %p154
      %p156 = scmp.ne.s32.totalorder %s148, %s150
      %p157 = scmp.eq.s32.totalorder %s25, 1
      %p158 = por %p156, %p157
      %p159 = scmp.ne.s32.totalorder %s150, %s151
      %p160 = scmp.eq.s32.totalorder %s25, 0
      %p161 = por %p159, %p160
      %p162 = scmp.ne.s32.totalorder %s150, %s151
      %p163 = scmp.eq.s32.totalorder %s26, 1
      %p164 = por %p162, %p163
      %p166 = scmp.ne.s32.totalorder %s151, %s165
      %p167 = scmp.eq.s32.totalorder %s26, 0
      %p168 = por %p166, %p167
      %s170 = sadd.s32 %s169, 1
      %p173 = scmp.eq.s32.totalorder %s20, 1
      %p174 = scmp.ne.s32.totalorder %s169, %s171
      %p175 = scmp.eq.s32.totalorder %s20, 0
      %p176 = por %p174, %p175
      %p177 = scmp.ne.s32.totalorder %s169, %s171
      %p178 = scmp.eq.s32.totalorder %s25, 1
      %p179 = por %p177, %p178
      %p180 = scmp.ne.s32.totalorder %s171, %s172
      %p181 = scmp.eq.s32.totalorder %s25, 0
      %p182 = por %p180, %p181
      %p183 = scmp.ne.s32.totalorder %s171, %s172
      %p184 = scmp.eq.s32.totalorder %s26, 1
      %p185 = por %p183, %p184
      %p187 = scmp.ne.s32.totalorder %s172, %s186
      %p188 = scmp.eq.s32.totalorder %s26, 0
      %p189 = por %p187, %p188
      %s191 = sadd.s32 %s190, 1
      %p194 = scmp.eq.s32.totalorder %s20, 1
      %p195 = scmp.ne.s32.totalorder %s190, %s192
      %p196 = scmp.eq.s32.totalorder %s20, 0
      %p197 = por %p195, %p196
      %p198 = scmp.ne.s32.totalorder %s190, %s192
      %p199 = scmp.eq.s32.totalorder %s25, 1
      %p200 = por %p198, %p199
      %p201 = scmp.ne.s32.totalorder %s192, %s193
      %p202 = scmp.eq.s32.totalorder %s25, 0
      %p203 = por %p201, %p202
      %p204 = scmp.ne.s32.totalorder %s192, %s193
      %p205 = scmp.eq.s32.totalorder %s26, 1
      %p206 = por %p204, %p205
      %p208 = scmp.ne.s32.totalorder %s193, %s207
      %p209 = scmp.eq.s32.totalorder %s26, 0
      %p210 = por %p208, %p209
      %s212 = sadd.s32 %s211, 1
      %p215 = scmp.eq.s32.totalorder %s20, 1
      %p216 = scmp.ne.s32.totalorder %s211, %s213
      %p217 = scmp.eq.s32.totalorder %s20, 0
      %p218 = por %p216, %p217
      %p219 = scmp.ne.s32.totalorder %s211, %s213
      %p220 = scmp.eq.s32.totalorder %s25, 1
      %p221 = por %p219, %p220
      %p222 = scmp.ne.s32.totalorder %s213, %s214
      %p223 = scmp.eq.s32.totalorder %s25, 0
      %p224 = por %p222, %p223
      %p225 = scmp.ne.s32.totalorder %s213, %s214
      %p226 = scmp.eq.s32.totalorder %s26, 1
      %p227 = por %p225, %p226
      %p229 = scmp.ne.s32.totalorder %s214, %s228
      %p230 = scmp.eq.s32.totalorder %s26, 0
      %p231 = por %p229, %p230
      %s232 = ssub.s32 %s20, %s27
      %p233 = scmp.eq.s32.totalorder %s232, 0
      %s235 = sadd.s32 %s234, 1
      %s236 = scalar_select %p233, %s234, %s235
      %p239 = pneg %p233
      %p240 = scmp.eq.s32.totalorder %s20, 1
      %p241 = por %p239, %p240
      %p242 = scmp.ne.s32.totalorder %s234, %s237
      %p243 = scmp.eq.s32.totalorder %s20, 0
      %p244 = por %p242, %p243
      %p245 = scmp.ne.s32.totalorder %s234, %s237
      %p246 = scmp.eq.s32.totalorder %s25, 1
      %p247 = por %p245, %p246
      %p248 = scmp.ne.s32.totalorder %s237, %s238
      %p249 = scmp.eq.s32.totalorder %s25, 0
      %p250 = por %p248, %p249
      %p251 = scmp.ne.s32.totalorder %s237, %s238
      %p252 = scmp.eq.s32.totalorder %s26, 1
      %p253 = por %p251, %p252
      %p255 = scmp.ne.s32.totalorder %s238, %s254
      %p256 = scmp.eq.s32.totalorder %s26, 0
      %p257 = por %p255, %p256
      %p258 = scmp.le.s32.totalorder 1, %s20
      %p259 = scmp.lt.s32.totalorder %s20, 3
      %p260 = pnand %p258, %p259
      %p261 = pneg %p260
      // Predicated region
      $region9: #{tpu_custom_call.1} parent=5 // pred_check
        _
      $region10: #{tpu_custom_call.1} parent=5 // pred_check_branch
        %263 = sbr.rel (%p260) target = $region12
      $region11: #{tpu_custom_call.1} parent=5 // pred_region
        %s264 = ssub.s32 %s20, 1
        // Predicated region
        $region13: #{tpu_custom_call.1} parent=11 // pred_check
          %p265 = pneg %p93
        $region14: #{tpu_custom_call.1} parent=11 // pred_check_branch
          %267 = sbr.rel (%p265) target = $region16
        $region15: #{tpu_custom_call.1} parent=11 // pred_region
          %s269 = ssub.s32 256, 256
          %270 = vsyncadd [#allocation3], %s269
          %s271 = sshll.u32 [#allocation2], 4
          %s272 = int_to_ptr.vmem [resolvable:$true] %s271
          %277 = dma.hbm_to_vmem [thread:$0]  %s2, 256, %s272, [#allocation3], 128, 128, 8
        $region16: #{tpu_custom_call.1} parent=11 // pred_fallthru
          _
        // Predicated region
        $region17: #{tpu_custom_call.1} parent=11 // pred_check
          %p278 = pneg %p140
        $region18: #{tpu_custom_call.1} parent=11 // pred_check_branch
          %280 = sbr.rel (%p278) target = $region20
        $region19: #{tpu_custom_call.1} parent=11 // pred_region
          _
        $region20: #{tpu_custom_call.1} parent=11 // pred_fallthru
          _
        // Predicated region
        $region21: #{tpu_custom_call.1} parent=11 // pred_check
          %p281 = pneg %p161
        $region22: #{tpu_custom_call.1} parent=11 // pred_check_branch
          %283 = sbr.rel (%p281) target = $region24
        $region23: #{tpu_custom_call.1} parent=11 // pred_region
          _
        $region24: #{tpu_custom_call.1} parent=11 // pred_fallthru
          _
        // Predicated region
        $region25: #{tpu_custom_call.1} parent=11 // pred_check
          %p284 = pneg %p182
        $region26: #{tpu_custom_call.1} parent=11 // pred_check_branch
          %286 = sbr.rel (%p284) target = $region28
        $region27: #{tpu_custom_call.1} parent=11 // pred_region
          %s288 = ssub.s32 128, 128
          %289 = vsyncadd [#allocation6], %s288
          %s291 = sshll.u32 [#allocation5], 4
          %s292 = int_to_ptr.vmem [resolvable:$true] %s291
          %294 = dma.hbm_to_vmem [thread:$0]  %s6, 128, %s292, [#allocation6]
        $region28: #{tpu_custom_call.1} parent=11 // pred_fallthru
          _
        // Predicated region
        $region29: #{tpu_custom_call.1} parent=11 // pred_check
          %p295 = pneg %p203
        $region30: #{tpu_custom_call.1} parent=11 // pred_check_branch
          %297 = sbr.rel (%p295) target = $region32
        $region31: #{tpu_custom_call.1} parent=11 // pred_region
          _
        $region32: #{tpu_custom_call.1} parent=11 // pred_fallthru
          _
        // Predicated region
        $region33: #{tpu_custom_call.1} parent=11 // pred_check
          %p298 = pneg %p224
        $region34: #{tpu_custom_call.1} parent=11 // pred_check_branch
          %300 = sbr.rel (%p298) target = $region36
        $region35: #{tpu_custom_call.1} parent=11 // pred_region
          _
        $region36: #{tpu_custom_call.1} parent=11 // pred_fallthru
          _
      $region12: #{tpu_custom_call.1} parent=5 // pred_fallthru
        _
      %p301 = scmp.lt.s32.totalorder %s20, 2
      // Predicated region
      $region37: #{tpu_custom_call.1} parent=5 // pred_check
        %p302 = pneg %p301
      $region38: #{tpu_custom_call.1} parent=5 // pred_check_branch
        %304 = sbr.rel (%p302) target = $region40
      $region39: #{tpu_custom_call.1} parent=5 // pred_region
        // Predicated region
        $region41: #{tpu_custom_call.1} parent=39 // pred_check
          %p305 = pneg %p40
        $region42: #{tpu_custom_call.1} parent=39 // pred_check_branch
          %307 = sbr.rel (%p305) target = $region44
        $region43: #{tpu_custom_call.1} parent=39 // pred_region
          %p308 = scmp.lt.s32.totalorder %s20, 1
          %s309 = scalar_select %p308, %s20, 1
          %s310 = smul.addr %s309, 2
          %s311 = smul.addr %s310, 8
          %s312 = scalar_lea.vmem %s0, %s311
        $region44: #{tpu_custom_call.1} parent=39 // pred_fallthru
          _
        // Predicated region
        $region45: #{tpu_custom_call.1} parent=39 // pred_check
          %p313 = pneg %p66
        $region46: #{tpu_custom_call.1} parent=39 // pred_check_branch
          %315 = sbr.rel (%p313) target = $region48
        $region47: #{tpu_custom_call.1} parent=39 // pred_region
          %p316 = scmp.lt.s32.totalorder %s20, 1
          %s317 = scalar_select %p316, %s20, 1
          %s318 = smul.addr %s317, 2
          %s319 = smul.addr %s318, 8
          %s320 = scalar_lea.vmem %s1, %s319
        $region48: #{tpu_custom_call.1} parent=39 // pred_fallthru
          _
        // Predicated region
        $region49: #{tpu_custom_call.1} parent=39 // pred_check
          %p321 = pneg %p113
        $region50: #{tpu_custom_call.1} parent=39 // pred_check_branch
          %323 = sbr.rel (%p321) target = $region52
        $region51: #{tpu_custom_call.1} parent=39 // pred_region
          %p324 = scmp.lt.s32.totalorder %s20, 1
          %s325 = scalar_select %p324, %s20, 1
          %s326 = smul.addr %s325, 2
          %s327 = smul.addr %s326, 8
          %s328 = scalar_lea.vmem %s3, %s327
        $region52: #{tpu_custom_call.1} parent=39 // pred_fallthru
          _
      $region40: #{tpu_custom_call.1} parent=5 // pred_fallthru
        _
      %p329 = scmp.le.s32.totalorder 1, %s20
      %p330 = scmp.lt.s32.totalorder %s20, 3
      %p331 = pnand %p329, %p330
      %p332 = pneg %p331
      // Predicated region
      $region53: #{tpu_custom_call.1} parent=5 // pred_check
        _
      $region54: #{tpu_custom_call.1} parent=5 // pred_check_branch
        %334 = sbr.rel (%p331) target = $region56
      $region55: #{tpu_custom_call.1} parent=5 // pred_region
        %s335 = ssub.s32 %s20, 1
        // Predicated region
        $region57: #{tpu_custom_call.1} parent=55 // pred_check
          %p336 = pneg %p93
        $region58: #{tpu_custom_call.1} parent=55 // pred_check_branch
          %338 = sbr.rel (%p336) target = $region60
        $region59: #{tpu_custom_call.1} parent=55 // pred_region
          %339 = dma.done [#allocation3], 256
        $region60: #{tpu_custom_call.1} parent=55 // pred_fallthru
          _
        // Predicated region
        $region61: #{tpu_custom_call.1} parent=55 // pred_check
          %p340 = pneg %p182
        $region62: #{tpu_custom_call.1} parent=55 // pred_check_branch
          %342 = sbr.rel (%p340) target = $region64
        $region63: #{tpu_custom_call.1} parent=55 // pred_region
          %343 = dma.done [#allocation6], 128
        $region64: #{tpu_custom_call.1} parent=55 // pred_fallthru
          _
        %p344 = scmp.lt.s32.totalorder %s25, 1
        %s345 = scalar_select %p344, %s25, 1
        %s346 = smul.addr %s345, 2
        %s347 = smul.addr %s346, 8
        %s348 = scalar_lea.vmem %s0, %s347
        %p349 = pneg %p46
        %p350 = pneg %p43
        %p351 = scmp.lt.s32.totalorder %s25, 1
        %s352 = scalar_select %p351, %s25, 1
        %s353 = smul.addr %s352, 2
        %s354 = smul.addr %s353, 8
        %s355 = scalar_lea.vmem %s1, %s354
        %p356 = pneg %p72
        %p357 = pneg %p69
        %p358 = pneg %p93
        %p359 = pneg %p90
        %p360 = scmp.lt.s32.totalorder %s25, 1
        %s361 = scalar_select %p360, %s25, 1
        %s362 = smul.addr %s361, 2
        %s363 = smul.addr %s362, 8
        %s364 = scalar_lea.vmem %s3, %s363
        %p365 = pneg %p119
        %p366 = pneg %p116
        %p367 = pneg %p140
        %p368 = pneg %p137
        %p369 = pneg %p161
        %p370 = pneg %p158
        %p371 = pneg %p182
        %p372 = pneg %p179
        %p373 = pneg %p203
        %p374 = pneg %p200
        %p375 = pneg %p224
        %p376 = pneg %p221
        %p377 = pneg %p250
        %p378 = pneg %p247
        %s379 = sand.u32 %s237, 1
        %s380 = scalar_lea.sflag [#allocation4], %s379
        %s381 = sand.u32 %s237, 1
        %s382 = smul.addr %s381, 8
        %s383 = scalar_lea.vmem [#allocation7], %s382
        %p384 = scmp.lt.s32.totalorder %s25, 1
        %s385 = scalar_select %p384, %s25, 1
        %s386 = smul.addr %s385, 2
        %s387 = smul.addr %s386, 8
        %s388 = scalar_lea.vmem %s0, %s387
        %p389 = scmp.lt.s32.totalorder %s25, 1
        %s390 = scalar_select %p389, %s25, 1
        %s391 = smul.addr %s390, 2
        %s392 = smul.addr %s391, 8
        %s393 = scalar_lea.vmem %s1, %s392
        %p394 = scmp.lt.s32.totalorder %s25, 1
        %s395 = scalar_select %p394, %s25, 1
        %s396 = smul.addr %s395, 2
        %s397 = smul.addr %s396, 8
        %s398 = scalar_lea.vmem %s3, %s397
        %v399 = vld [vmem:[%s388] sm:$0xff]
        %v400 = vld [vmem:[%s388 + $0x8] sm:$0xff]
        %v401 = vlaneseq
        %v402 = vand.u32 %v401, 127
        %403 = vset.pattern.permute.xlu0 0
        %404 = vperm.xlu0 %403, %v399
        %v405 = vpop.permute.xlu0 %404
        %406 = vset.pattern.permute.xlu0 0
        %407 = vperm.xlu0 %406, %v400
        %v408 = vpop.permute.xlu0 %407
        %vm409 = vcmp.eq.s32.totalorder %v405, %v402
        %vm410 = vcmp.eq.s32.totalorder %v408, %v402
        %v411 = vsel %vm409, 1, 0
        %v412 = vsel %vm410, 1, 0
        %v413 = vcvt.s32.f32 %v411
        %v414 = vcvt.s32.f32 %v412
        %v415 = vld [vmem:[%s393] sm:$0xff]
        %v416 = vld [vmem:[%s393 + $0x8] sm:$0xff]
        %417 = vset.pattern.permute.xlu0 0
        %418 = vperm.xlu0 %417, %v415
        %v419 = vpop.permute.xlu0 %418
        %420 = vset.pattern.permute.xlu0 0
        %421 = vperm.xlu0 %420, %v416
        %v422 = vpop.permute.xlu0 %421
        %vm423 = vcmp.eq.s32.totalorder %v419, %v402
        %vm424 = vcmp.eq.s32.totalorder %v422, %v402
        %v425 = vsel %vm423, 1, 0
        %v426 = vsel %vm424, 1, 0
        %v427 = vcvt.s32.f32 %v425
        %v428 = vcvt.s32.f32 %v426
        %v429 = vld [vmem:[%s4] sm:$0xff]
        %vm430 = vcmask 64512
        %v432 = vsel %vm430, %v413, 0
        %v435 = vsel %vm430, %v414, 0
        %437 = vmatprep.subr.mxu0 0.0
        %438 = vmatpush1.msra.mxu0 0.0
        %439 = vmatprep.subr.mxu0 0.0
        %440 = vmatpush1.msra.mxu0 0.0
        %441 = vmatprep.subr.mxu0 0.0
        %442 = vmatpush1.msra.mxu0 0.0
        %443 = vmatprep.subr.mxu0 0.0
        %444 = vmatpush1.msra.mxu0 0.0
        %445 = vmatprep.subr.mxu0 0.0
        %446 = vmatpush1.msra.mxu0 0.0
        %447 = vmatprep.subr.mxu0 0.0
        %448 = vmatpush1.msra.mxu0 0.0
        %449 = vmatprep.subr.mxu0 0.0
        %450 = vmatpush1.msra.mxu0 0.0
        %451 = vmatprep.subr.mxu0 0.0
        %452 = vmatpush1.msra.mxu0 0.0
        %453 = vmatprep.subr.mxu0 0.0
        %454 = vmatpush1.msra.mxu0 0.0
        %455 = vmatprep.subr.mxu0 0.0
        %456 = vmatpush1.msra.mxu0 0.0
        %457 = vmatprep.subr.mxu0 0.0
        %458 = vmatpush1.msra.mxu0 0.0
        %459 = vmatprep.subr.mxu0 0.0
        %460 = vmatpush1.msra.mxu0 0.0
        %461 = vmatprep.subr.mxu0 0.0
        %462 = vmatpush1.msra.mxu0 0.0
        %463 = vmatprep.subr.mxu0 0.0
        %464 = vmatpush1.msra.mxu0 0.0
        %465 = vmatprep.subr.mxu0 0.0
        %466 = vmatpush1.msra.mxu0 0.0
        %467 = vmatprep.subr.mxu0 0.0
        %468 = vmatpush1.msra.mxu0 %v429
        %469 = vmatprep.subr.mxu0 0.0
        %470 = vmatpush2.msra.mxu0 0.0
        %471 = vmatprep.subr.mxu0 0.0
        %472 = vmatpush2.msra.mxu0 0.0
        %473 = vmatprep.subr.mxu0 0.0
        %474 = vmatpush2.msra.mxu0 0.0
        %475 = vmatprep.subr.mxu0 0.0
        %476 = vmatpush2.msra.mxu0 0.0
        %477 = vmatprep.subr.mxu0 0.0
        %478 = vmatpush2.msra.mxu0 0.0
        %479 = vmatprep.subr.mxu0 0.0
        %480 = vmatpush2.msra.mxu0 0.0
        %481 = vmatprep.subr.mxu0 0.0
        %482 = vmatpush2.msra.mxu0 0.0
        %483 = vmatprep.subr.mxu0 0.0
        %484 = vmatpush2.msra.mxu0 0.0
        %485 = vmatprep.subr.mxu0 0.0
        %486 = vmatpush2.msra.mxu0 0.0
        %487 = vmatprep.subr.mxu0 0.0
        %488 = vmatpush2.msra.mxu0 0.0
        %489 = vmatprep.subr.mxu0 0.0
        %490 = vmatpush2.msra.mxu0 0.0
        %491 = vmatprep.subr.mxu0 0.0
        %492 = vmatpush2.msra.mxu0 0.0
        %493 = vmatprep.subr.mxu0 0.0
        %494 = vmatpush2.msra.mxu0 0.0
        %495 = vmatprep.subr.mxu0 0.0
        %496 = vmatpush2.msra.mxu0 0.0
        %497 = vmatprep.subr.mxu0 0.0
        %498 = vmatpush2.msra.mxu0 0.0
        %499 = vmatprep.subr.mxu0 0.0
        %500 = vmatpush2.msra.mxu0 0.0
        %501 = vmatprep.mubr.f32.mxu0 0.0
        %502 = vmatmul.mubr.f32.gmra.mxu0 %v432
        %v503 = vpop.f32.mrf.mxu0
        %v504 = vadd.f32 0.0, %v503
        %v505 = vpop.f32.mrf.mxu0
        %506 = vmatprep.mubr.f32.mxu0 0.0
        %507 = vmatmul.mubr.f32.gmra.mxu0 %v435
        %v508 = vpop.f32.mrf.mxu0
        %v509 = vadd.f32 0.0, %v508
        %v510 = vpop.f32.mrf.mxu0
        %511 = vdwg.mxu0
        %v512 = vld [vmem:[%s5] sm:$0xff]
        %v513 = vld [vmem:[%s5 + $0x8] sm:$0xff]
        %v514 = vld [vmem:[%s5 + $0x10] sm:$0xff]
        %v515 = vld [vmem:[%s5 + $0x18] sm:$0xff]
        %vm516 = vcmask 261120
        %v518 = vsel %vm516, %v504, 0
        %v521 = vsel %vm516, %v509, 0
        %523 = vmatprep.subr.mxu0 0.0
        %524 = vmatpush1.msra.mxu0 0.0
        %525 = vmatprep.subr.mxu0 0.0
        %526 = vmatpush1.msra.mxu0 0.0
        %527 = vmatprep.subr.mxu0 0.0
        %528 = vmatpush1.msra.mxu0 0.0
        %529 = vmatprep.subr.mxu0 0.0
        %530 = vmatpush1.msra.mxu0 0.0
        %531 = vmatprep.subr.mxu0 0.0
        %532 = vmatpush1.msra.mxu0 0.0
        %533 = vmatprep.subr.mxu0 0.0
        %534 = vmatpush1.msra.mxu0 0.0
        %535 = vmatprep.subr.mxu0 0.0
        %536 = vmatpush1.msra.mxu0 0.0
        %537 = vmatprep.subr.mxu0 0.0
        %538 = vmatpush1.msra.mxu0 0.0
        %539 = vmatprep.subr.mxu0 0.0
        %540 = vmatpush1.msra.mxu0 0.0
        %541 = vmatprep.subr.mxu0 0.0
        %542 = vmatpush1.msra.mxu0 0.0
        %543 = vmatprep.subr.mxu0 0.0
        %544 = vmatpush1.msra.mxu0 0.0
        %545 = vmatprep.subr.mxu0 0.0
        %546 = vmatpush1.msra.mxu0 0.0
        %547 = vmatprep.subr.mxu0 0.0
        %548 = vmatpush1.msra.mxu0 %v515
        %549 = vmatprep.subr.mxu0 0.0
        %550 = vmatpush1.msra.mxu0 %v514
        %551 = vmatprep.subr.mxu0 0.0
        %552 = vmatpush1.msra.mxu0 %v513
        %553 = vmatprep.subr.mxu0 0.0
        %554 = vmatpush1.msra.mxu0 %v512
        %555 = vmatprep.subr.mxu0 0.0
        %556 = vmatpush2.msra.mxu0 0.0
        %557 = vmatprep.subr.mxu0 0.0
        %558 = vmatpush2.msra.mxu0 0.0
        %559 = vmatprep.subr.mxu0 0.0
        %560 = vmatpush2.msra.mxu0 0.0
        %561 = vmatprep.subr.mxu0 0.0
        %562 = vmatpush2.msra.mxu0 0.0
        %563 = vmatprep.subr.mxu0 0.0
        %564 = vmatpush2.msra.mxu0 0.0
        %565 = vmatprep.subr.mxu0 0.0
        %566 = vmatpush2.msra.mxu0 0.0
        %567 = vmatprep.subr.mxu0 0.0
        %568 = vmatpush2.msra.mxu0 0.0
        %569 = vmatprep.subr.mxu0 0.0
        %570 = vmatpush2.msra.mxu0 0.0
        %571 = vmatprep.subr.mxu0 0.0
        %572 = vmatpush2.msra.mxu0 0.0
        %573 = vmatprep.subr.mxu0 0.0
        %574 = vmatpush2.msra.mxu0 0.0
        %575 = vmatprep.subr.mxu0 0.0
        %576 = vmatpush2.msra.mxu0 0.0
        %577 = vmatprep.subr.mxu0 0.0
        %578 = vmatpush2.msra.mxu0 0.0
        %579 = vmatprep.subr.mxu0 0.0
        %580 = vmatpush2.msra.mxu0 0.0
        %581 = vmatprep.subr.mxu0 0.0
        %582 = vmatpush2.msra.mxu0 0.0
        %583 = vmatprep.subr.mxu0 0.0
        %584 = vmatpush2.msra.mxu0 0.0
        %585 = vmatprep.subr.mxu0 0.0
        %586 = vmatpush2.msra.mxu0 0.0
        %587 = vmatprep.mubr.f32.mxu0 0.0
        %588 = vmatmul.mubr.f32.gmra.mxu0 %v518
        %v589 = vpop.f32.mrf.mxu0
        %v590 = vadd.f32 0.0, %v589
        %v591 = vpop.f32.mrf.mxu0
        %592 = vmatprep.mubr.f32.mxu0 0.0
        %593 = vmatmul.mubr.f32.gmra.mxu0 %v521
        %v594 = vpop.f32.mrf.mxu0
        %v595 = vadd.f32 0.0, %v594
        %v596 = vpop.f32.mrf.mxu0
        %597 = vdwg.mxu0
        %v598 = vmax.f32 %v590, 0.0
        %v599 = vmax.f32 %v595, 0.0
        %v600 = vld [vmem:[#allocation2] sm:$0xff]
        %v601 = vld [vmem:[#allocation2 + $0x8] sm:$0xff]
        %vm602 = vcmask 130048
        %v604 = vsel %vm602, %v600, 0
        %v607 = vsel %vm602, %v601, 0
        %609 = vmatprep.subr.mxu0 0.0
        %610 = vmatpush1.msra.mxu0 0.0
        %611 = vmatprep.subr.mxu0 0.0
        %612 = vmatpush1.msra.mxu0 0.0
        %613 = vmatprep.subr.mxu0 0.0
        %614 = vmatpush1.msra.mxu0 0.0
        %615 = vmatprep.subr.mxu0 0.0
        %616 = vmatpush1.msra.mxu0 0.0
        %617 = vmatprep.subr.mxu0 0.0
        %618 = vmatpush1.msra.mxu0 0.0
        %619 = vmatprep.subr.mxu0 0.0
        %620 = vmatpush1.msra.mxu0 0.0
        %621 = vmatprep.subr.mxu0 0.0
        %622 = vmatpush1.msra.mxu0 0.0
        %623 = vmatprep.subr.mxu0 0.0
        %624 = vmatpush1.msra.mxu0 0.0
        %625 = vmatprep.subr.mxu0 0.0
        %626 = vmatpush1.msra.mxu0 0.0
        %627 = vmatprep.subr.mxu0 0.0
        %628 = vmatpush1.msra.mxu0 0.0
        %629 = vmatprep.subr.mxu0 0.0
        %630 = vmatpush1.msra.mxu0 0.0
        %631 = vmatprep.subr.mxu0 0.0
        %632 = vmatpush1.msra.mxu0 0.0
        %633 = vmatprep.subr.mxu0 0.0
        %634 = vmatpush1.msra.mxu0 0.0
        %635 = vmatprep.subr.mxu0 0.0
        %636 = vmatpush1.msra.mxu0 0.0
        %637 = vmatprep.subr.mxu0 0.0
        %638 = vmatpush1.msra.mxu0 %v599
        %639 = vmatprep.subr.mxu0 0.0
        %640 = vmatpush1.msra.mxu0 %v598
        %641 = vmatprep.subr.mxu0 0.0
        %642 = vmatpush2.msra.mxu0 0.0
        %643 = vmatprep.subr.mxu0 0.0
        %644 = vmatpush2.msra.mxu0 0.0
        %645 = vmatprep.subr.mxu0 0.0
        %646 = vmatpush2.msra.mxu0 0.0
        %647 = vmatprep.subr.mxu0 0.0
        %648 = vmatpush2.msra.mxu0 0.0
        %649 = vmatprep.subr.mxu0 0.0
        %650 = vmatpush2.msra.mxu0 0.0
        %651 = vmatprep.subr.mxu0 0.0
        %652 = vmatpush2.msra.mxu0 0.0
        %653 = vmatprep.subr.mxu0 0.0
        %654 = vmatpush2.msra.mxu0 0.0
        %655 = vmatprep.subr.mxu0 0.0
        %656 = vmatpush2.msra.mxu0 0.0
        %657 = vmatprep.subr.mxu0 0.0
        %658 = vmatpush2.msra.mxu0 0.0
        %659 = vmatprep.subr.mxu0 0.0
        %660 = vmatpush2.msra.mxu0 0.0
        %661 = vmatprep.subr.mxu0 0.0
        %662 = vmatpush2.msra.mxu0 0.0
        %663 = vmatprep.subr.mxu0 0.0
        %664 = vmatpush2.msra.mxu0 0.0
        %665 = vmatprep.subr.mxu0 0.0
        %666 = vmatpush2.msra.mxu0 0.0
        %667 = vmatprep.subr.mxu0 0.0
        %668 = vmatpush2.msra.mxu0 0.0
        %669 = vmatprep.subr.mxu0 0.0
        %670 = vmatpush2.msra.mxu0 0.0
        %671 = vmatprep.subr.mxu0 0.0
        %672 = vmatpush2.msra.mxu0 0.0
        %673 = vmatprep.mubr.f32.mxu0 0.0
        %674 = vmatmul.mubr.f32.gmra.mxu0 %v604
        %v675 = vpop.f32.mrf.mxu0
        %v676 = vadd.f32 0.0, %v675
        %v677 = vpop.f32.mrf.mxu0
        %678 = vmatprep.mubr.f32.mxu0 0.0
        %679 = vmatmul.mubr.f32.gmra.mxu0 %v607
        %v680 = vpop.f32.mrf.mxu0
        %v681 = vadd.f32 0.0, %v680
        %v682 = vpop.f32.mrf.mxu0
        %683 = vdwg.mxu0
        %v684 = vld [vmem:[#allocation5] sm:$0xff]
        %v686 = vsel %vm430, %v427, 0
        %v689 = vsel %vm430, %v428, 0
        %691 = vmatprep.subr.mxu0 0.0
        %692 = vmatpush1.msra.mxu0 0.0
        %693 = vmatprep.subr.mxu0 0.0
        %694 = vmatpush1.msra.mxu0 0.0
        %695 = vmatprep.subr.mxu0 0.0
        %696 = vmatpush1.msra.mxu0 0.0
        %697 = vmatprep.subr.mxu0 0.0
        %698 = vmatpush1.msra.mxu0 0.0
        %699 = vmatprep.subr.mxu0 0.0
        %700 = vmatpush1.msra.mxu0 0.0
        %701 = vmatprep.subr.mxu0 0.0
        %702 = vmatpush1.msra.mxu0 0.0
        %703 = vmatprep.subr.mxu0 0.0
        %704 = vmatpush1.msra.mxu0 0.0
        %705 = vmatprep.subr.mxu0 0.0
        %706 = vmatpush1.msra.mxu0 0.0
        %707 = vmatprep.subr.mxu0 0.0
        %708 = vmatpush1.msra.mxu0 0.0
        %709 = vmatprep.subr.mxu0 0.0
        %710 = vmatpush1.msra.mxu0 0.0
        %711 = vmatprep.subr.mxu0 0.0
        %712 = vmatpush1.msra.mxu0 0.0
        %713 = vmatprep.subr.mxu0 0.0
        %714 = vmatpush1.msra.mxu0 0.0
        %715 = vmatprep.subr.mxu0 0.0
        %716 = vmatpush1.msra.mxu0 0.0
        %717 = vmatprep.subr.mxu0 0.0
        %718 = vmatpush1.msra.mxu0 0.0
        %719 = vmatprep.subr.mxu0 0.0
        %720 = vmatpush1.msra.mxu0 0.0
        %721 = vmatprep.subr.mxu0 0.0
        %722 = vmatpush1.msra.mxu0 %v684
        %723 = vmatprep.subr.mxu0 0.0
        %724 = vmatpush2.msra.mxu0 0.0
        %725 = vmatprep.subr.mxu0 0.0
        %726 = vmatpush2.msra.mxu0 0.0
        %727 = vmatprep.subr.mxu0 0.0
        %728 = vmatpush2.msra.mxu0 0.0
        %729 = vmatprep.subr.mxu0 0.0
        %730 = vmatpush2.msra.mxu0 0.0
        %731 = vmatprep.subr.mxu0 0.0
        %732 = vmatpush2.msra.mxu0 0.0
        %733 = vmatprep.subr.mxu0 0.0
        %734 = vmatpush2.msra.mxu0 0.0
        %735 = vmatprep.subr.mxu0 0.0
        %736 = vmatpush2.msra.mxu0 0.0
        %737 = vmatprep.subr.mxu0 0.0
        %738 = vmatpush2.msra.mxu0 0.0
        %739 = vmatprep.subr.mxu0 0.0
        %740 = vmatpush2.msra.mxu0 0.0
        %741 = vmatprep.subr.mxu0 0.0
        %742 = vmatpush2.msra.mxu0 0.0
        %743 = vmatprep.subr.mxu0 0.0
        %744 = vmatpush2.msra.mxu0 0.0
        %745 = vmatprep.subr.mxu0 0.0
        %746 = vmatpush2.msra.mxu0 0.0
        %747 = vmatprep.subr.mxu0 0.0
        %748 = vmatpush2.msra.mxu0 0.0
        %749 = vmatprep.subr.mxu0 0.0
        %750 = vmatpush2.msra.mxu0 0.0
        %751 = vmatprep.subr.mxu0 0.0
        %752 = vmatpush2.msra.mxu0 0.0
        %753 = vmatprep.subr.mxu0 0.0
        %754 = vmatpush2.msra.mxu0 0.0
        %755 = vmatprep.mubr.f32.mxu0 0.0
        %756 = vmatmul.mubr.f32.gmra.mxu0 %v686
        %v757 = vpop.f32.mrf.mxu0
        %v758 = vadd.f32 0.0, %v757
        %v759 = vpop.f32.mrf.mxu0
        %760 = vmatprep.mubr.f32.mxu0 0.0
        %761 = vmatmul.mubr.f32.gmra.mxu0 %v689
        %v762 = vpop.f32.mrf.mxu0
        %v763 = vadd.f32 0.0, %v762
        %v764 = vpop.f32.mrf.mxu0
        %765 = vdwg.mxu0
        %v766 = vld [vmem:[%s7] sm:$0xff]
        %v767 = vld [vmem:[%s7 + $0x8] sm:$0xff]
        %v768 = vld [vmem:[%s7 + $0x10] sm:$0xff]
        %v769 = vld [vmem:[%s7 + $0x18] sm:$0xff]
        %v771 = vsel %vm516, %v758, 0
        %v774 = vsel %vm516, %v763, 0
        %776 = vmatprep.subr.mxu0 0.0
        %777 = vmatpush1.msra.mxu0 0.0
        %778 = vmatprep.subr.mxu0 0.0
        %779 = vmatpush1.msra.mxu0 0.0
        %780 = vmatprep.subr.mxu0 0.0
        %781 = vmatpush1.msra.mxu0 0.0
        %782 = vmatprep.subr.mxu0 0.0
        %783 = vmatpush1.msra.mxu0 0.0
        %784 = vmatprep.subr.mxu0 0.0
        %785 = vmatpush1.msra.mxu0 0.0
        %786 = vmatprep.subr.mxu0 0.0
        %787 = vmatpush1.msra.mxu0 0.0
        %788 = vmatprep.subr.mxu0 0.0
        %789 = vmatpush1.msra.mxu0 0.0
        %790 = vmatprep.subr.mxu0 0.0
        %791 = vmatpush1.msra.mxu0 0.0
        %792 = vmatprep.subr.mxu0 0.0
        %793 = vmatpush1.msra.mxu0 0.0
        %794 = vmatprep.subr.mxu0 0.0
        %795 = vmatpush1.msra.mxu0 0.0
        %796 = vmatprep.subr.mxu0 0.0
        %797 = vmatpush1.msra.mxu0 0.0
        %798 = vmatprep.subr.mxu0 0.0
        %799 = vmatpush1.msra.mxu0 0.0
        %800 = vmatprep.subr.mxu0 0.0
        %801 = vmatpush1.msra.mxu0 %v769
        %802 = vmatprep.subr.mxu0 0.0
        %803 = vmatpush1.msra.mxu0 %v768
        %804 = vmatprep.subr.mxu0 0.0
        %805 = vmatpush1.msra.mxu0 %v767
        %806 = vmatprep.subr.mxu0 0.0
        %807 = vmatpush1.msra.mxu0 %v766
        %808 = vmatprep.subr.mxu0 0.0
        %809 = vmatpush2.msra.mxu0 0.0
        %810 = vmatprep.subr.mxu0 0.0
        %811 = vmatpush2.msra.mxu0 0.0
        %812 = vmatprep.subr.mxu0 0.0
        %813 = vmatpush2.msra.mxu0 0.0
        %814 = vmatprep.subr.mxu0 0.0
        %815 = vmatpush2.msra.mxu0 0.0
        %816 = vmatprep.subr.mxu0 0.0
        %817 = vmatpush2.msra.mxu0 0.0
        %818 = vmatprep.subr.mxu0 0.0
        %819 = vmatpush2.msra.mxu0 0.0
        %820 = vmatprep.subr.mxu0 0.0
        %821 = vmatpush2.msra.mxu0 0.0
        %822 = vmatprep.subr.mxu0 0.0
        %823 = vmatpush2.msra.mxu0 0.0
        %824 = vmatprep.subr.mxu0 0.0
        %825 = vmatpush2.msra.mxu0 0.0
        %826 = vmatprep.subr.mxu0 0.0
        %827 = vmatpush2.msra.mxu0 0.0
        %828 = vmatprep.subr.mxu0 0.0
        %829 = vmatpush2.msra.mxu0 0.0
        %830 = vmatprep.subr.mxu0 0.0
        %831 = vmatpush2.msra.mxu0 0.0
        %832 = vmatprep.subr.mxu0 0.0
        %833 = vmatpush2.msra.mxu0 0.0
        %834 = vmatprep.subr.mxu0 0.0
        %835 = vmatpush2.msra.mxu0 0.0
        %836 = vmatprep.subr.mxu0 0.0
        %837 = vmatpush2.msra.mxu0 0.0
        %838 = vmatprep.subr.mxu0 0.0
        %839 = vmatpush2.msra.mxu0 0.0
        %840 = vmatprep.mubr.f32.mxu0 0.0
        %841 = vmatmul.mubr.f32.gmra.mxu0 %v771
        %v842 = vpop.f32.mrf.mxu0
        %v843 = vadd.f32 %v676, %v842
        %v844 = vpop.f32.mrf.mxu0
        %845 = vmatprep.mubr.f32.mxu0 0.0
        %846 = vmatmul.mubr.f32.gmra.mxu0 %v774
        %v847 = vpop.f32.mrf.mxu0
        %v848 = vadd.f32 %v681, %v847
        %v849 = vpop.f32.mrf.mxu0
        %850 = vdwg.mxu0
        %v851 = vmax.f32 %v843, 0.0
        %v852 = vmax.f32 %v848, 0.0
        %v853 = vld [vmem:[%s8] sm:$0xff]
        %v854 = vld [vmem:[%s8 + $0x8] sm:$0xff]
        %v855 = vld [vmem:[%s8 + $0x10] sm:$0xff]
        %v856 = vld [vmem:[%s8 + $0x18] sm:$0xff]
        %v858 = vsel %vm516, %v851, 0
        %v861 = vsel %vm516, %v852, 0
        %863 = vmatprep.subr.mxu0 0.0
        %864 = vmatpush1.msra.mxu0 0.0
        %865 = vmatprep.subr.mxu0 0.0
        %866 = vmatpush1.msra.mxu0 0.0
        %867 = vmatprep.subr.mxu0 0.0
        %868 = vmatpush1.msra.mxu0 0.0
        %869 = vmatprep.subr.mxu0 0.0
        %870 = vmatpush1.msra.mxu0 0.0
        %871 = vmatprep.subr.mxu0 0.0
        %872 = vmatpush1.msra.mxu0 0.0
        %873 = vmatprep.subr.mxu0 0.0
        %874 = vmatpush1.msra.mxu0 0.0
        %875 = vmatprep.subr.mxu0 0.0
        %876 = vmatpush1.msra.mxu0 0.0
        %877 = vmatprep.subr.mxu0 0.0
        %878 = vmatpush1.msra.mxu0 0.0
        %879 = vmatprep.subr.mxu0 0.0
        %880 = vmatpush1.msra.mxu0 0.0
        %881 = vmatprep.subr.mxu0 0.0
        %882 = vmatpush1.msra.mxu0 0.0
        %883 = vmatprep.subr.mxu0 0.0
        %884 = vmatpush1.msra.mxu0 0.0
        %885 = vmatprep.subr.mxu0 0.0
        %886 = vmatpush1.msra.mxu0 0.0
        %887 = vmatprep.subr.mxu0 0.0
        %888 = vmatpush1.msra.mxu0 %v856
        %889 = vmatprep.subr.mxu0 0.0
        %890 = vmatpush1.msra.mxu0 %v855
        %891 = vmatprep.subr.mxu0 0.0
        %892 = vmatpush1.msra.mxu0 %v854
        %893 = vmatprep.subr.mxu0 0.0
        %894 = vmatpush1.msra.mxu0 %v853
        %895 = vmatprep.subr.mxu0 0.0
        %896 = vmatpush2.msra.mxu0 0.0
        %897 = vmatprep.subr.mxu0 0.0
        %898 = vmatpush2.msra.mxu0 0.0
        %899 = vmatprep.subr.mxu0 0.0
        %900 = vmatpush2.msra.mxu0 0.0
        %901 = vmatprep.subr.mxu0 0.0
        %902 = vmatpush2.msra.mxu0 0.0
        %903 = vmatprep.subr.mxu0 0.0
        %904 = vmatpush2.msra.mxu0 0.0
        %905 = vmatprep.subr.mxu0 0.0
        %906 = vmatpush2.msra.mxu0 0.0
        %907 = vmatprep.subr.mxu0 0.0
        %908 = vmatpush2.msra.mxu0 0.0
        %909 = vmatprep.subr.mxu0 0.0
        %910 = vmatpush2.msra.mxu0 0.0
        %911 = vmatprep.subr.mxu0 0.0
        %912 = vmatpush2.msra.mxu0 0.0
        %913 = vmatprep.subr.mxu0 0.0
        %914 = vmatpush2.msra.mxu0 0.0
        %915 = vmatprep.subr.mxu0 0.0
        %916 = vmatpush2.msra.mxu0 0.0
        %917 = vmatprep.subr.mxu0 0.0
        %918 = vmatpush2.msra.mxu0 0.0
        %919 = vmatprep.subr.mxu0 0.0
        %920 = vmatpush2.msra.mxu0 0.0
        %921 = vmatprep.subr.mxu0 0.0
        %922 = vmatpush2.msra.mxu0 0.0
        %923 = vmatprep.subr.mxu0 0.0
        %924 = vmatpush2.msra.mxu0 0.0
        %925 = vmatprep.subr.mxu0 0.0
        %926 = vmatpush2.msra.mxu0 0.0
        %927 = vmatprep.mubr.f32.mxu0 0.0
        %928 = vmatmul.mubr.f32.gmra.mxu0 %v858
        %v929 = vpop.f32.mrf.mxu0
        %v930 = vadd.f32 0.0, %v929
        %v931 = vpop.f32.mrf.mxu0
        %932 = vmatprep.mubr.f32.mxu0 0.0
        %933 = vmatmul.mubr.f32.gmra.mxu0 %v861
        %v934 = vpop.f32.mrf.mxu0
        %v935 = vadd.f32 0.0, %v934
        %v936 = vpop.f32.mrf.mxu0
        %937 = vdwg.mxu0
        %v938 = vsel %vm430, %v930, -inf
        %939 = vmax.xlane.f32.xlu0 %v938
        %v940 = vpop.xlane.xlu0 %939
        %v941 = vsel %vm430, %v935, -inf
        %942 = vmax.xlane.f32.xlu0 %v941
        %v943 = vpop.xlane.xlu0 %942
        %v944 = vsub.f32 %v930, %v940
        %v945 = vsub.f32 %v935, %v943
        %v946 = vmul.f32 %v944, 1.442695
        %v947 = vpow.pop %v946
        %v948 = vmul.f32 %v945, 1.442695
        %v949 = vpow.pop %v948
        %v950 = vsel %vm430, %v947, 0.0
        %951 = vadd.xlane.f32.xlu0 %v950
        %v952 = vpop.xlane.xlu0 %951
        %v953 = vsel %vm430, %v949, 0.0
        %954 = vadd.xlane.f32.xlu0 %v953
        %v955 = vpop.xlane.xlu0 %954
        %v956 = vlog2.pop %v952
        %v957 = vmul.f32 %v956, 0.6931472
        %v958 = vlog2.pop %v955
        %v959 = vmul.f32 %v958, 0.6931472
        %v960 = vsub.f32 %v944, %v957
        %v961 = vsub.f32 %v945, %v959
        %v962 = vld [vmem:[%s398] sm:$0xff]
        %s963 = scalar_lea.vmem %s398, 8
        %v964 = vld [vmem:[%s963] sm:$0xff]
        %v966 = vsel %vm430, %v961, 0
        %968 = vmatprep.subr.mxu0 0.0
        %969 = vmatpush1.msra.mxu0 0.0
        %970 = vmatprep.subr.mxu0 0.0
        %971 = vmatpush1.msra.mxu0 0.0
        %972 = vmatprep.subr.mxu0 0.0
        %973 = vmatpush1.msra.mxu0 0.0
        %974 = vmatprep.subr.mxu0 0.0
        %975 = vmatpush1.msra.mxu0 0.0
        %976 = vmatprep.subr.mxu0 0.0
        %977 = vmatpush1.msra.mxu0 0.0
        %978 = vmatprep.subr.mxu0 0.0
        %979 = vmatpush1.msra.mxu0 0.0
        %980 = vmatprep.subr.mxu0 0.0
        %981 = vmatpush1.msra.mxu0 0.0
        %982 = vmatprep.subr.mxu0 0.0
        %983 = vmatpush1.msra.mxu0 0.0
        %984 = vmatprep.subr.mxu0 0.0
        %985 = vmatpush1.msra.mxu0 0.0
        %986 = vmatprep.subr.mxu0 0.0
        %987 = vmatpush1.msra.mxu0 0.0
        %988 = vmatprep.subr.mxu0 0.0
        %989 = vmatpush1.msra.mxu0 0.0
        %990 = vmatprep.subr.mxu0 0.0
        %991 = vmatpush1.msra.mxu0 0.0
        %992 = vmatprep.subr.mxu0 0.0
        %993 = vmatpush1.msra.mxu0 0.0
        %994 = vmatprep.subr.mxu0 0.0
        %995 = vmatpush1.msra.mxu0 0.0
        %996 = vmatprep.subr.mxu0 0.0
        %997 = vmatpush1.msra.mxu0 0.0
        %998 = vmatprep.subr.mxu0 0.0
        %999 = vmatpush1.msra.mxu0 %v964
        %1000 = vmatprep.subr.mxu0 0.0
        %1001 = vmatpush2.msra.mxu0 0.0
        %1002 = vmatprep.subr.mxu0 0.0
        %1003 = vmatpush2.msra.mxu0 0.0
        %1004 = vmatprep.subr.mxu0 0.0
        %1005 = vmatpush2.msra.mxu0 0.0
        %1006 = vmatprep.subr.mxu0 0.0
        %1007 = vmatpush2.msra.mxu0 0.0
        %1008 = vmatprep.subr.mxu0 0.0
        %1009 = vmatpush2.msra.mxu0 0.0
        %1010 = vmatprep.subr.mxu0 0.0
        %1011 = vmatpush2.msra.mxu0 0.0
        %1012 = vmatprep.subr.mxu0 0.0
        %1013 = vmatpush2.msra.mxu0 0.0
        %1014 = vmatprep.subr.mxu0 0.0
        %1015 = vmatpush2.msra.mxu0 0.0
        %1016 = vmatprep.subr.mxu0 0.0
        %1017 = vmatpush2.msra.mxu0 0.0
        %1018 = vmatprep.subr.mxu0 0.0
        %1019 = vmatpush2.msra.mxu0 0.0
        %1020 = vmatprep.subr.mxu0 0.0
        %1021 = vmatpush2.msra.mxu0 0.0
        %1022 = vmatprep.subr.mxu0 0.0
        %1023 = vmatpush2.msra.mxu0 0.0
        %1024 = vmatprep.subr.mxu0 0.0
        %1025 = vmatpush2.msra.mxu0 0.0
        %1026 = vmatprep.subr.mxu0 0.0
        %1027 = vmatpush2.msra.mxu0 0.0
        %1028 = vmatprep.subr.mxu0 0.0
        %1029 = vmatpush2.msra.mxu0 0.0
        %1030 = vmatprep.subr.mxu0 0.0
        %1031 = vmatpush2.msra.mxu0 0.0
        %1032 = vmatprep.mubr.f32.mxu0 0.0
        %1033 = vmatmul.mubr.f32.gmra.mxu0 %v966
        %v1034 = vpop.f32.mrf.mxu0
        %v1035 = vadd.f32 0.0, %v1034
        %v1036 = vpop.f32.mrf.mxu0
        %1037 = vdwg.mxu0
        %v1039 = vsel %vm430, %v960, 0
        %1041 = vmatprep.subr.mxu0 0.0
        %1042 = vmatpush1.msra.mxu0 0.0
        %1043 = vmatprep.subr.mxu0 0.0
        %1044 = vmatpush1.msra.mxu0 0.0
        %1045 = vmatprep.subr.mxu0 0.0
        %1046 = vmatpush1.msra.mxu0 0.0
        %1047 = vmatprep.subr.mxu0 0.0
        %1048 = vmatpush1.msra.mxu0 0.0
        %1049 = vmatprep.subr.mxu0 0.0
        %1050 = vmatpush1.msra.mxu0 0.0
        %1051 = vmatprep.subr.mxu0 0.0
        %1052 = vmatpush1.msra.mxu0 0.0
        %1053 = vmatprep.subr.mxu0 0.0
        %1054 = vmatpush1.msra.mxu0 0.0
        %1055 = vmatprep.subr.mxu0 0.0
        %1056 = vmatpush1.msra.mxu0 0.0
        %1057 = vmatprep.subr.mxu0 0.0
        %1058 = vmatpush1.msra.mxu0 0.0
        %1059 = vmatprep.subr.mxu0 0.0
        %1060 = vmatpush1.msra.mxu0 0.0
        %1061 = vmatprep.subr.mxu0 0.0
        %1062 = vmatpush1.msra.mxu0 0.0
        %1063 = vmatprep.subr.mxu0 0.0
        %1064 = vmatpush1.msra.mxu0 0.0
        %1065 = vmatprep.subr.mxu0 0.0
        %1066 = vmatpush1.msra.mxu0 0.0
        %1067 = vmatprep.subr.mxu0 0.0
        %1068 = vmatpush1.msra.mxu0 0.0
        %1069 = vmatprep.subr.mxu0 0.0
        %1070 = vmatpush1.msra.mxu0 0.0
        %1071 = vmatprep.subr.mxu0 0.0
        %1072 = vmatpush1.msra.mxu0 %v962
        %1073 = vmatprep.subr.mxu0 0.0
        %1074 = vmatpush2.msra.mxu0 0.0
        %1075 = vmatprep.subr.mxu0 0.0
        %1076 = vmatpush2.msra.mxu0 0.0
        %1077 = vmatprep.subr.mxu0 0.0
        %1078 = vmatpush2.msra.mxu0 0.0
        %1079 = vmatprep.subr.mxu0 0.0
        %1080 = vmatpush2.msra.mxu0 0.0
        %1081 = vmatprep.subr.mxu0 0.0
        %1082 = vmatpush2.msra.mxu0 0.0
        %1083 = vmatprep.subr.mxu0 0.0
        %1084 = vmatpush2.msra.mxu0 0.0
        %1085 = vmatprep.subr.mxu0 0.0
        %1086 = vmatpush2.msra.mxu0 0.0
        %1087 = vmatprep.subr.mxu0 0.0
        %1088 = vmatpush2.msra.mxu0 0.0
        %1089 = vmatprep.subr.mxu0 0.0
        %1090 = vmatpush2.msra.mxu0 0.0
        %1091 = vmatprep.subr.mxu0 0.0
        %1092 = vmatpush2.msra.mxu0 0.0
        %1093 = vmatprep.subr.mxu0 0.0
        %1094 = vmatpush2.msra.mxu0 0.0
        %1095 = vmatprep.subr.mxu0 0.0
        %1096 = vmatpush2.msra.mxu0 0.0
        %1097 = vmatprep.subr.mxu0 0.0
        %1098 = vmatpush2.msra.mxu0 0.0
        %1099 = vmatprep.subr.mxu0 0.0
        %1100 = vmatpush2.msra.mxu0 0.0
        %1101 = vmatprep.subr.mxu0 0.0
        %1102 = vmatpush2.msra.mxu0 0.0
        %1103 = vmatprep.subr.mxu0 0.0
        %1104 = vmatpush2.msra.mxu0 0.0
        %1105 = vmatprep.mubr.f32.mxu0 0.0
        %1106 = vmatmul.mubr.f32.gmra.mxu0 %v1039
        %v1107 = vpop.f32.mrf.mxu0
        %v1108 = vadd.f32 %v1035, %v1107
        %v1109 = vpop.f32.mrf.mxu0
        %1110 = vdwg.mxu0
        %1111 = vst.msk [vmem:[%s383] sm:$0xff] %vm430, %v1108
        %s1112 = sand.u32 %s237, 1
        %s1113 = scalar_lea.sflag [#allocation4], %s1112
        %s1114 = sand.u32 %s237, 1
        %s1115 = smul.addr %s1114, 8
        %s1116 = scalar_lea.vmem [#allocation7], %s1115
        // Predicated region
        $region65: #{tpu_custom_call.1} parent=55 // pred_check
          %p1117 = pneg %p247
        $region66: #{tpu_custom_call.1} parent=55 // pred_check_branch
          %1119 = sbr.rel (%p1117) target = $region68
        $region67: #{tpu_custom_call.1} parent=55 // pred_region
          %s1121 = ssub.s32 128, 128
          %1122 = vsyncadd %s1113, %s1121
          %s1123 = smul.addr %s25, 128
          %s1124 = scalar_lea.hbm %s9, %s1123
          %s1126 = sshll.u32 %s1116, 4
          %s1127 = int_to_ptr.vmem [resolvable:$true] %s1126
          %1129 = dma.vmem_to_hbm [thread:$0]  %s1127, 128, %s1124, %s1113
        $region68: #{tpu_custom_call.1} parent=55 // pred_fallthru
          _
      $region56: #{tpu_custom_call.1} parent=5 // pred_fallthru
        _
      %p1130 = scmp.le.s32.totalorder 2, %s20
      // Predicated region
      $region69: #{tpu_custom_call.1} parent=5 // pred_check
        %p1131 = pneg %p1130
      $region70: #{tpu_custom_call.1} parent=5 // pred_check_branch
        %1133 = sbr.rel (%p1131) target = $region72
      $region71: #{tpu_custom_call.1} parent=5 // pred_region
        %s1134 = ssub.s32 %s20, 2
        // Predicated region
        $region73: #{tpu_custom_call.1} parent=71 // pred_check
          %p1135 = pneg %p253
        $region74: #{tpu_custom_call.1} parent=71 // pred_check_branch
          %1137 = sbr.rel (%p1135) target = $region76
        $region75: #{tpu_custom_call.1} parent=71 // pred_region
          %s1138 = sand.u32 %s238, 1
          %s1139 = scalar_lea.sflag [#allocation4], %s1138
          %s1140 = sand.u32 %s238, 1
          %s1141 = smul.addr %s1140, 8
          %s1142 = scalar_lea.vmem [#allocation7], %s1141
          %1143 = dma.done %s1139, 128
        $region76: #{tpu_custom_call.1} parent=71 // pred_fallthru
          _
      $region72: #{tpu_custom_call.1} parent=5 // pred_fallthru
        _
    $region6: #{tpu_custom_call.1} parent=1 // loop_footer
      %s24 = sadd.s32 1, %s20
    $region7: #{tpu_custom_call.1} parent=1 // loop_footer_branch
      %19 = sbr.rel target = $region3
    $region8: #{tpu_custom_call.1} parent=1 // loop_exit
      _
    %1144 = vsyncpa [#allocation3], 1
    %s1145 = scalar_lea.sflag [#allocation3], 1
    %1146 = vsyncpa %s1145, 1
    %1147 = vsyncpa [#allocation6], 1
    %1148 = vsyncpa [#allocation4], 1
    %s1149 = scalar_lea.sflag [#allocation4], 1
    %1150 = vsyncpa %s1149, 1

</llo_original>
